<compile_context>
chip_gen: v7x
topology: tpu7x:2x2x1
jax: 0.10.0
libtpu: 0.0.40
codegen_flags: <defaults>
</compile_context>

<pallas_src>
import functools

import jax
import jax.numpy as jnp
from jax import lax
from jax.experimental import pallas as pl
from jax.experimental.pallas import tpu as pltpu


def _round_up(n, m):
    return -(-n // m) * m


def _cdiv(a, b):
    return -(-a // b)


def mdn_kernel(x_ref, w1_ref, b1_ref, w2_ref, b2_ref, wh_ref, bh_ref, out_ref,
               *, input_dim, num_mixtures):
    """Fully transposed: features/hidden/head rows on sublanes, batch on lanes."""
    # ---- hidden layer 1 on the VPU ----
    # Contraction depth == input_dim (2): far too shallow for the MXU, so do it
    # as `input_dim` outer-product FMAs instead.
    w1 = w1_ref[...]                                    # [HP, D]   (tiny)
    xt = x_ref[...]                                     # [D,  TB]
    h = b1_ref[...]                                     # [HP, 1]
    for d in range(input_dim):                          # static, tiny loop
        h = h + w1[:, d:d + 1] * xt[d:d + 1, :]         # [HP,1]*[1,TB] -> [HP,TB]
    h = jnp.maximum(h, 0.0)

    # ---- hidden layer 2 (MXU, full 128-wide operands) ----
    h = jnp.dot(w2_ref[...], h, preferred_element_type=jnp.float32) + b2_ref[...]
    h = jnp.maximum(h, 0.0)

    # ---- fused heads: [RP, HP] @ [HP, TB] -> [RP, TB]  (RP = pad(3K, 8)) ----
    y = jnp.dot(wh_ref[...], h, preferred_element_type=jnp.float32) + bh_ref[...]

    # exp() only on the log_std rows [2K, 3K); pi/mu/padding rows pass through.
    row = lax.broadcasted_iota(jnp.int32, y.shape, dimension=0)
    is_log_std = (row >= 2 * num_mixtures) & (row < 3 * num_mixtures)
    out_ref[...] = jnp.where(is_log_std, jnp.exp(y), y).astype(out_ref.dtype)


def prepare_params(params):
    """One-time packing of weights into the kernel's transposed, padded layout.

    Call once and cache the result (pure data movement).
    Returns (packed_arrays_dict, num_mixtures).
    """
    D, H = params["w1"].shape
    K = params["w_pi"].shape[1]
    HP = _round_up(H, 128)            # lane/sublane-dense hidden width
    RP = _round_up(3 * K, 8)          # fused head rows padded to sublane multiple

    z = functools.partial(jnp.zeros, dtype=jnp.float32)

    w1t = z((HP, D)).at[:H, :].set(params["w1"].T)
    b1 = z((HP, 1)).at[:H, :].set(params["b1"].T)
    w2t = z((HP, HP)).at[:H, :H].set(params["w2"].T)
    b2 = z((HP, 1)).at[:H, :].set(params["b2"].T)

    wh = jnp.concatenate([params["w_pi"], params["w_mu"], params["w_ls"]], axis=1).T
    bh = jnp.concatenate([params["b_pi"], params["b_mu"], params["b_ls"]], axis=1).T
    wht = z((RP, HP)).at[:3 * K, :H].set(wh)
    bht = z((RP, 1)).at[:3 * K, :].set(bh)

    packed = dict(w1t=w1t, b1=b1, w2t=w2t, b2=b2, wht=wht, bht=bht)
    return packed, K


def _choose_batch_tile(B, batch_tile, min_steps=2):
    """Pick a lane-dense (multiple-of-128) batch tile.

    Keeps per-step tiles <= batch_tile, keeps batch padding small (< 128 per
    grid step), and aims for >= `min_steps` grid steps once B is large enough
    so v7x can split the parallel batch axis across both TensorCores.
    """
    steps = _cdiv(B, batch_tile)
    if B >= 2 * 128:
        steps = max(steps, min_steps)
    return _round_up(_cdiv(B, steps), 128)


def mdn_forward(x, packed, *, num_mixtures, batch_tile=4096):
    """MDN forward pass. Returns (pi_logits, mu, std), each [B, num_mixtures]."""
    B, D = x.shape
    K = num_mixtures
    RP = packed["wht"].shape[0]

    tb = _choose_batch_tile(B, batch_tile)
    bp = _round_up(B, tb)
    grid = (bp // tb,)

    # Lane-dense input: [D, BP] (one contiguous row per input feature).
    xt = jnp.zeros((D, bp), jnp.float32).at[:, :B].set(x.T)

    def const_spec(a):
        return pl.BlockSpec(a.shape, lambda i: (0, 0))

    inputs = (xt, packed["w1t"], packed["b1"], packed["w2t"], packed["b2"],
              packed["wht"], packed["bht"])
    in_specs = [pl.BlockSpec((D, tb), lambda i: (0, i))]
    in_specs += [const_spec(a) for a in inputs[1:]]

    out = pl.pallas_call(
        functools.partial(mdn_kernel, input_dim=D, num_mixtures=K),
        out_shape=jax.ShapeDtypeStruct((RP, bp), jnp.float32),
        grid=grid,
        in_specs=in_specs,
        out_specs=pl.BlockSpec((RP, tb), lambda i: (0, i)),
        compiler_params=pltpu.CompilerParams(
            dimension_semantics=("parallel",)),
    )(*inputs)

    out = out[:, :B]
    pi_logits = out[:K, :].T
    mu = out[K:2 * K, :].T
    std = out[2 * K:3 * K, :].T
    return pi_logits, mu, std


def init_params(key, input_dim=2, hidden_dim=64, num_mixtures=3):
    """Deterministic init mimicking PyTorch nn.Linear (uniform +/- 1/sqrt(fan_in)).

    Weights are stored transposed relative to PyTorch: [in_features, out_features].
    Biases are stored as [1, out_features].
    """
    def linear(key, fan_in, fan_out):
        kw, kb = jax.random.split(key)
        bound = 1.0 / jnp.sqrt(fan_in)
        w = jax.random.uniform(kw, (fan_in, fan_out), jnp.float32, -bound, bound)
        b = jax.random.uniform(kb, (1, fan_out), jnp.float32, -bound, bound)
        return w, b

    k1, k2, k3, k4, k5 = jax.random.split(key, 5)
    w1, b1 = linear(k1, input_dim, hidden_dim)
    w2, b2 = linear(k2, hidden_dim, hidden_dim)
    w_pi, b_pi = linear(k3, hidden_dim, num_mixtures)
    w_mu, b_mu = linear(k4, hidden_dim, num_mixtures)
    w_ls, b_ls = linear(k5, hidden_dim, num_mixtures)
    return dict(w1=w1, b1=b1, w2=w2, b2=b2,
                w_pi=w_pi, b_pi=b_pi, w_mu=w_mu, b_mu=b_mu,
                w_ls=w_ls, b_ls=b_ls)


def mdn_forward_ref(x, p):
    """Pure-JAX reference for correctness checking."""
    h = jnp.maximum(x @ p["w1"] + p["b1"], 0.0)
    h = jnp.maximum(h @ p["w2"] + p["b2"], 0.0)
    pi_logits = h @ p["w_pi"] + p["b_pi"]
    mu = h @ p["w_mu"] + p["b_mu"]
    std = jnp.exp(h @ p["w_ls"] + p["b_ls"])
    return pi_logits, mu, std


if __name__ == "__main__":
    key = jax.random.PRNGKey(0)
    kp, kx = jax.random.split(key)

    input_dim, hidden_dim, num_mixtures = 2, 64, 3
    batch = 8

    params = init_params(kp, input_dim, hidden_dim, num_mixtures)
    x = jax.random.normal(kx, (batch, input_dim), jnp.float32)

    # One-time weight packing (cache this across calls), jitted forward wrapper.
    packed, K = prepare_params(params)
    fwd = jax.jit(functools.partial(mdn_forward, num_mixtures=K))

    pi_logits, mu, std = fwd(x, packed)
    jax.block_until_ready((pi_logits, mu, std))

    # verify against pure-JAX reference
    pi_ref, mu_ref, std_ref = mdn_forward_ref(x, params)
    assert pi_logits.shape == (batch, num_mixtures)
    assert mu.shape == (batch, num_mixtures)
    assert std.shape == (batch, num_mixtures)
    assert jnp.allclose(pi_logits, pi_ref, atol=1e-5, rtol=1e-4)
    assert jnp.allclose(mu, mu_ref, atol=1e-5, rtol=1e-4)
    assert jnp.allclose(std, std_ref, atol=1e-5, rtol=1e-4)

    # TODO(synk): distribution utilities (sampling, posterior_robust, mixture
    # mean/variance) are host-side torch.distributions code outside forward().
    print("KERNEL_OK")
</pallas_src>

<mosaic_0001>
module attributes {stable_mosaic.version = 11 : i64} {
  func.func @mdn_kernel(%arg0: i32, %arg1: memref<2x128xf32, #tpu.memory_space<vmem>>, %arg2: memref<128x2xf32, #tpu.memory_space<vmem>>, %arg3: memref<128x1xf32, #tpu.memory_space<vmem>>, %arg4: memref<128x128xf32, #tpu.memory_space<vmem>>, %arg5: memref<128x1xf32, #tpu.memory_space<vmem>>, %arg6: memref<16x128xf32, #tpu.memory_space<vmem>>, %arg7: memref<16x1xf32, #tpu.memory_space<vmem>>, %arg8: memref<16x128xf32, #tpu.memory_space<vmem>>) attributes {dimension_semantics = [#tpu.dimension_semantics<parallel>], iteration_bounds = array<i64: 1>, scalar_prefetch = 0 : i64, scratch_operands = 0 : i64, tpu.core_type = #tpu.core_type<tc>, window_params = [{transform_indices = @transform_0, window_bounds = array<i64: 2, 128>}, {pipeline_mode = #tpu.pipeline_mode<synchronous>, transform_indices = @transform_1, window_bounds = array<i64: 128, 2>}, {pipeline_mode = #tpu.pipeline_mode<synchronous>, transform_indices = @transform_2, window_bounds = array<i64: 128, 1>}, {pipeline_mode = #tpu.pipeline_mode<synchronous>, transform_indices = @transform_3, window_bounds = array<i64: 128, 128>}, {pipeline_mode = #tpu.pipeline_mode<synchronous>, transform_indices = @transform_4, window_bounds = array<i64: 128, 1>}, {pipeline_mode = #tpu.pipeline_mode<synchronous>, transform_indices = @transform_5, window_bounds = array<i64: 16, 128>}, {pipeline_mode = #tpu.pipeline_mode<synchronous>, transform_indices = @transform_6, window_bounds = array<i64: 16, 1>}, {transform_indices = @transform_7, window_bounds = array<i64: 16, 128>}]} {
    %c0 = arith.constant 0 : index
    %c0_0 = arith.constant 0 : index
    %0 = vector.load %arg2[%c0, %c0_0] : memref<128x2xf32, #tpu.memory_space<vmem>>, vector<128x2xf32>
    %c0_1 = arith.constant 0 : index
    %c0_2 = arith.constant 0 : index
    %1 = vector.load %arg1[%c0_1, %c0_2] : memref<2x128xf32, #tpu.memory_space<vmem>>, vector<2x128xf32>
    %c0_3 = arith.constant 0 : index
    %c0_4 = arith.constant 0 : index
    %2 = vector.load %arg3[%c0_3, %c0_4] : memref<128x1xf32, #tpu.memory_space<vmem>>, vector<128x1xf32>
    %3 = vector.extract_strided_slice %0 {offsets = [0, 0], sizes = [128, 1], strides = [1, 1]} : vector<128x2xf32> to vector<128x1xf32>
    %4 = vector.extract_strided_slice %1 {offsets = [0, 0], sizes = [1, 128], strides = [1, 1]} : vector<2x128xf32> to vector<1x128xf32>
    %5 = vector.broadcast %3 : vector<128x1xf32> to vector<128x128xf32>
    %6 = vector.broadcast %4 : vector<1x128xf32> to vector<128x128xf32>
    %7 = arith.mulf %5, %6 : vector<128x128xf32>
    %8 = vector.broadcast %2 : vector<128x1xf32> to vector<128x128xf32>
    %9 = arith.addf %8, %7 : vector<128x128xf32>
    %10 = vector.extract_strided_slice %0 {offsets = [0, 1], sizes = [128, 1], strides = [1, 1]} : vector<128x2xf32> to vector<128x1xf32>
    %11 = vector.extract_strided_slice %1 {offsets = [1, 0], sizes = [1, 128], strides = [1, 1]} : vector<2x128xf32> to vector<1x128xf32>
    %12 = vector.broadcast %10 : vector<128x1xf32> to vector<128x128xf32>
    %13 = vector.broadcast %11 : vector<1x128xf32> to vector<128x128xf32>
    %14 = arith.mulf %12, %13 : vector<128x128xf32>
    %15 = arith.addf %9, %14 : vector<128x128xf32>
    %cst = arith.constant 0.000000e+00 : f32
    %16 = vector.broadcast %cst : f32 to vector<128x128xf32>
    %17 = arith.maximumf %15, %16 : vector<128x128xf32>
    %c0_5 = arith.constant 0 : index
    %c0_6 = arith.constant 0 : index
    %18 = vector.load %arg4[%c0_5, %c0_6] : memref<128x128xf32, #tpu.memory_space<vmem>>, vector<128x128xf32>
    %cst_7 = arith.constant dense<0.000000e+00> : vector<128x128xf32>
    %19 = tpu.matmul %18, %17, %cst_7 {dimension_numbers = #tpu.dot_dimension_numbers<[1], [0], [0], [1], [0, 0, 1, 1], [], []>} : vector<128x128xf32>, vector<128x128xf32>, vector<128x128xf32> -> vector<128x128xf32>
    %c0_8 = arith.constant 0 : index
    %c0_9 = arith.constant 0 : index
    %20 = vector.load %arg5[%c0_8, %c0_9] : memref<128x1xf32, #tpu.memory_space<vmem>>, vector<128x1xf32>
    %21 = vector.broadcast %20 : vector<128x1xf32> to vector<128x128xf32>
    %22 = arith.addf %19, %21 : vector<128x128xf32>
    %cst_10 = arith.constant 0.000000e+00 : f32
    %23 = vector.broadcast %cst_10 : f32 to vector<128x128xf32>
    %24 = arith.maximumf %22, %23 : vector<128x128xf32>
    %c0_11 = arith.constant 0 : index
    %c0_12 = arith.constant 0 : index
    %25 = vector.load %arg6[%c0_11, %c0_12] : memref<16x128xf32, #tpu.memory_space<vmem>>, vector<16x128xf32>
    %cst_13 = arith.constant dense<0.000000e+00> : vector<16x128xf32>
    %26 = tpu.matmul %25, %24, %cst_13 {dimension_numbers = #tpu.dot_dimension_numbers<[1], [0], [0], [1], [0, 0, 1, 1], [], []>} : vector<16x128xf32>, vector<128x128xf32>, vector<16x128xf32> -> vector<16x128xf32>
    %c0_14 = arith.constant 0 : index
    %c0_15 = arith.constant 0 : index
    %27 = vector.load %arg7[%c0_14, %c0_15] : memref<16x1xf32, #tpu.memory_space<vmem>>, vector<16x1xf32>
    %28 = vector.broadcast %27 : vector<16x1xf32> to vector<16x128xf32>
    %29 = arith.addf %26, %28 : vector<16x128xf32>
    %30 = tpu.iota {dimensions = array<i32: 0>} : vector<16x128xi32>
    %c6_i32 = arith.constant 6 : i32
    %31 = vector.broadcast %c6_i32 : i32 to vector<16x128xi32>
    %32 = arith.cmpi sge, %30, %31 : vector<16x128xi32>
    %c9_i32 = arith.constant 9 : i32
    %33 = vector.broadcast %c9_i32 : i32 to vector<16x128xi32>
    %34 = arith.cmpi slt, %30, %33 : vector<16x128xi32>
    %35 = arith.andi %32, %34 : vector<16x128xi1>
    %36 = math.exp %29 : vector<16x128xf32>
    %37 = arith.select %35, %36, %29 : vector<16x128xi1>, vector<16x128xf32>
    %c0_16 = arith.constant 0 : index
    %c0_17 = arith.constant 0 : index
    %38 = vector.load %arg8[%c0_16, %c0_17] : memref<16x128xf32, #tpu.memory_space<vmem>>, vector<16x128xf32>
    tpu.vector_store %arg8[%c0_16, %c0_17], %37 {strides = array<i32>} : memref<16x128xf32, #tpu.memory_space<vmem>>, vector<16x128xf32>,
    return
  }
  func.func @transform_0(%arg0: i32) -> (i32, i32) {
    %c0_i32 = arith.constant 0 : i32
    %c0_i32_0 = arith.constant 0 : i32
    return %c0_i32, %arg0 : i32, i32
  }
  func.func @transform_1(%arg0: i32) -> (i32, i32) {
    %c0_i32 = arith.constant 0 : i32
    %c0_i32_0 = arith.constant 0 : i32
    %c0_i32_1 = arith.constant 0 : i32
    return %c0_i32, %c0_i32_0 : i32, i32
  }
  func.func @transform_2(%arg0: i32) -> (i32, i32) {
    %c0_i32 = arith.constant 0 : i32
    %c0_i32_0 = arith.constant 0 : i32
    %c0_i32_1 = arith.constant 0 : i32
    return %c0_i32, %c0_i32_0 : i32, i32
  }
  func.func @transform_3(%arg0: i32) -> (i32, i32) {
    %c0_i32 = arith.constant 0 : i32
    %c0_i32_0 = arith.constant 0 : i32
    %c0_i32_1 = arith.constant 0 : i32
    return %c0_i32, %c0_i32_0 : i32, i32
  }
  func.func @transform_4(%arg0: i32) -> (i32, i32) {
    %c0_i32 = arith.constant 0 : i32
    %c0_i32_0 = arith.constant 0 : i32
    %c0_i32_1 = arith.constant 0 : i32
    return %c0_i32, %c0_i32_0 : i32, i32
  }
  func.func @transform_5(%arg0: i32) -> (i32, i32) {
    %c0_i32 = arith.constant 0 : i32
    %c0_i32_0 = arith.constant 0 : i32
    %c0_i32_1 = arith.constant 0 : i32
    return %c0_i32, %c0_i32_0 : i32, i32
  }
  func.func @transform_6(%arg0: i32) -> (i32, i32) {
    %c0_i32 = arith.constant 0 : i32
    %c0_i32_0 = arith.constant 0 : i32
    %c0_i32_1 = arith.constant 0 : i32
    return %c0_i32, %c0_i32_0 : i32, i32
  }
  func.func @transform_7(%arg0: i32) -> (i32, i32) {
    %c0_i32 = arith.constant 0 : i32
    %c0_i32_0 = arith.constant 0 : i32
    return %c0_i32, %arg0 : i32, i32
  }
}

</mosaic_0001>

<llo_original>
// kernel: mdn_forward.1
$region0: #{mdn_forward.1}
  #allocation0 [shape = 'u32[]', space=smem, size = 0x4, offset = 0x4, fixed_abs, tag = 'smem constant byte address 0x4 - core index']
  #allocation1 [shape = 'u32[144,128]{1,0:T(1,128)}', space=vmem, size = 0x12000, scoped, tag = 'internal scratch']
  %s0 = inlined_call_operand.vmem [shape: f32[2,128], index: 0, kind: input, shape index: {}]
  %s1 = inlined_call_operand.vmem [shape: f32[128,2], index: 1, kind: input, shape index: {}]
  %s2 = inlined_call_operand.vmem [shape: f32[128,1], index: 2, kind: input, shape index: {}]
  %s3 = inlined_call_operand.vmem [shape: f32[128,128], index: 3, kind: input, shape index: {}]
  %s4 = inlined_call_operand.vmem [shape: f32[128,1], index: 4, kind: input, shape index: {}]
  %s5 = inlined_call_operand.vmem [shape: f32[16,128], index: 5, kind: input, shape index: {}]
  %s6 = inlined_call_operand.vmem [shape: f32[16,1], index: 6, kind: input, shape index: {}]
  %s7 = inlined_call_operand.vmem [shape: f32[16,128], index: 7, kind: output, shape index: {}]
  %s8 = sld [smem:[#allocation0]]
  $region38: #{mdn_forward.1} parent=0
    _
  %s10 = ssub.s32 1, %s8
  %s11 = scalar_select 0, %s10, %s8
  // Predicated region
  $region2: #{mdn_forward.1} parent=0 // pred_check
    _
  $region3: #{mdn_forward.1} parent=0 // pred_check_branch
    %13 = sbr.rel (0) target = $region5
  $region4: #{mdn_forward.1} parent=0 // pred_region
    _
  $region5: #{mdn_forward.1} parent=0 // pred_fallthru
    _
  // Predicated region
  $region6: #{mdn_forward.1} parent=0 // pred_check
    _
  $region7: #{mdn_forward.1} parent=0 // pred_check_branch
    %15 = sbr.rel (0) target = $region9
  $region8: #{mdn_forward.1} parent=0 // pred_region
    _
  $region9: #{mdn_forward.1} parent=0 // pred_fallthru
    _
  // Predicated region
  $region10: #{mdn_forward.1} parent=0 // pred_check
    _
  $region11: #{mdn_forward.1} parent=0 // pred_check_branch
    %17 = sbr.rel (0) target = $region13
  $region12: #{mdn_forward.1} parent=0 // pred_region
    _
  $region13: #{mdn_forward.1} parent=0 // pred_fallthru
    _
  // Predicated region
  $region14: #{mdn_forward.1} parent=0 // pred_check
    _
  $region15: #{mdn_forward.1} parent=0 // pred_check_branch
    %19 = sbr.rel (0) target = $region17
  $region16: #{mdn_forward.1} parent=0 // pred_region
    _
  $region17: #{mdn_forward.1} parent=0 // pred_fallthru
    _
  // Predicated region
  $region18: #{mdn_forward.1} parent=0 // pred_check
    _
  $region19: #{mdn_forward.1} parent=0 // pred_check_branch
    %21 = sbr.rel (0) target = $region21
  $region20: #{mdn_forward.1} parent=0 // pred_region
    _
  $region21: #{mdn_forward.1} parent=0 // pred_fallthru
    _
  // Predicated region
  $region22: #{mdn_forward.1} parent=0 // pred_check
    _
  $region23: #{mdn_forward.1} parent=0 // pred_check_branch
    %23 = sbr.rel (0) target = $region25
  $region24: #{mdn_forward.1} parent=0 // pred_region
    _
  $region25: #{mdn_forward.1} parent=0 // pred_fallthru
    _
  // Predicated region
  $region26: #{mdn_forward.1} parent=0 // pred_check
    _
  $region27: #{mdn_forward.1} parent=0 // pred_check_branch
    %25 = sbr.rel (0) target = $region29
  $region28: #{mdn_forward.1} parent=0 // pred_region
    _
  $region29: #{mdn_forward.1} parent=0 // pred_fallthru
    _
  %v26 = vld [vmem:[%s1] sm:$0xff]
  %v27 = vld [vmem:[%s1 + $0x8] sm:$0xff]
  %v28 = vld [vmem:[%s1 + $0x10] sm:$0xff]
  %v29 = vld [vmem:[%s1 + $0x18] sm:$0xff]
  %v30 = vld [vmem:[%s1 + $0x20] sm:$0xff]
  %v31 = vld [vmem:[%s1 + $0x28] sm:$0xff]
  %v32 = vld [vmem:[%s1 + $0x30] sm:$0xff]
  %v33 = vld [vmem:[%s1 + $0x38] sm:$0xff]
  %v34 = vld [vmem:[%s1 + $0x40] sm:$0xff]
  %v35 = vld [vmem:[%s1 + $0x48] sm:$0xff]
  %v36 = vld [vmem:[%s1 + $0x50] sm:$0xff]
  %v37 = vld [vmem:[%s1 + $0x58] sm:$0xff]
  %v38 = vld [vmem:[%s1 + $0x60] sm:$0xff]
  %v39 = vld [vmem:[%s1 + $0x68] sm:$0xff]
  %v40 = vld [vmem:[%s1 + $0x70] sm:$0xff]
  %v41 = vld [vmem:[%s1 + $0x78] sm:$0xff]
  %v42 = vld [vmem:[%s0] sm:$0x3]
  %v43 = vld [vmem:[%s2] sm:$0xff]
  %v44 = vld [vmem:[%s2 + $0x8] sm:$0xff]
  %v45 = vld [vmem:[%s2 + $0x10] sm:$0xff]
  %v46 = vld [vmem:[%s2 + $0x18] sm:$0xff]
  %v47 = vld [vmem:[%s2 + $0x20] sm:$0xff]
  %v48 = vld [vmem:[%s2 + $0x28] sm:$0xff]
  %v49 = vld [vmem:[%s2 + $0x30] sm:$0xff]
  %v50 = vld [vmem:[%s2 + $0x38] sm:$0xff]
  %v51 = vld [vmem:[%s2 + $0x40] sm:$0xff]
  %v52 = vld [vmem:[%s2 + $0x48] sm:$0xff]
  %v53 = vld [vmem:[%s2 + $0x50] sm:$0xff]
  %v54 = vld [vmem:[%s2 + $0x58] sm:$0xff]
  %v55 = vld [vmem:[%s2 + $0x60] sm:$0xff]
  %v56 = vld [vmem:[%s2 + $0x68] sm:$0xff]
  %v57 = vld [vmem:[%s2 + $0x70] sm:$0xff]
  %v58 = vld [vmem:[%s2 + $0x78] sm:$0xff]
  %60 = vset.pattern.permute.xlu0 0
  %61 = vperm.xlu0 %60, %v26
  %v62 = vpop.permute.xlu0 %61
  %65 = vset.pattern.permute.xlu0 0
  %66 = vperm.xlu0 %65, %v27
  %v67 = vpop.permute.xlu0 %66
  %70 = vset.pattern.permute.xlu0 0
  %71 = vperm.xlu0 %70, %v28
  %v72 = vpop.permute.xlu0 %71
  %75 = vset.pattern.permute.xlu0 0
  %76 = vperm.xlu0 %75, %v29
  %v77 = vpop.permute.xlu0 %76
  %80 = vset.pattern.permute.xlu0 0
  %81 = vperm.xlu0 %80, %v30
  %v82 = vpop.permute.xlu0 %81
  %85 = vset.pattern.permute.xlu0 0
  %86 = vperm.xlu0 %85, %v31
  %v87 = vpop.permute.xlu0 %86
  %90 = vset.pattern.permute.xlu0 0
  %91 = vperm.xlu0 %90, %v32
  %v92 = vpop.permute.xlu0 %91
  %95 = vset.pattern.permute.xlu0 0
  %96 = vperm.xlu0 %95, %v33
  %v97 = vpop.permute.xlu0 %96
  %100 = vset.pattern.permute.xlu0 0
  %101 = vperm.xlu0 %100, %v34
  %v102 = vpop.permute.xlu0 %101
  %105 = vset.pattern.permute.xlu0 0
  %106 = vperm.xlu0 %105, %v35
  %v107 = vpop.permute.xlu0 %106
  %110 = vset.pattern.permute.xlu0 0
  %111 = vperm.xlu0 %110, %v36
  %v112 = vpop.permute.xlu0 %111
  %115 = vset.pattern.permute.xlu0 0
  %116 = vperm.xlu0 %115, %v37
  %v117 = vpop.permute.xlu0 %116
  %120 = vset.pattern.permute.xlu0 0
  %121 = vperm.xlu0 %120, %v38
  %v122 = vpop.permute.xlu0 %121
  %125 = vset.pattern.permute.xlu0 0
  %126 = vperm.xlu0 %125, %v39
  %v127 = vpop.permute.xlu0 %126
  %130 = vset.pattern.permute.xlu0 0
  %131 = vperm.xlu0 %130, %v40
  %v132 = vpop.permute.xlu0 %131
  %135 = vset.pattern.permute.xlu0 0
  %136 = vperm.xlu0 %135, %v41
  %v137 = vpop.permute.xlu0 %136
  %v139 = vlaneseq
  %v140 = vshrl.u32 %v139, 7
  %v141 = vsub.s32 0, %v140
  %v142 = vrot.slane %v42, %v141
  %v143 = vmul.f32 %v62, %v142
  %v144 = vmul.f32 %v67, %v142
  %v145 = vmul.f32 %v72, %v142
  %v146 = vmul.f32 %v77, %v142
  %v147 = vmul.f32 %v82, %v142
  %v148 = vmul.f32 %v87, %v142
  %v149 = vmul.f32 %v92, %v142
  %v150 = vmul.f32 %v97, %v142
  %v151 = vmul.f32 %v102, %v142
  %v152 = vmul.f32 %v107, %v142
  %v153 = vmul.f32 %v112, %v142
  %v154 = vmul.f32 %v117, %v142
  %v155 = vmul.f32 %v122, %v142
  %v156 = vmul.f32 %v127, %v142
  %v157 = vmul.f32 %v132, %v142
  %v158 = vmul.f32 %v137, %v142
  %160 = vset.pattern.permute.xlu0 0
  %161 = vperm.xlu0 %160, %v43
  %v162 = vpop.permute.xlu0 %161
  %165 = vset.pattern.permute.xlu0 0
  %166 = vperm.xlu0 %165, %v44
  %v167 = vpop.permute.xlu0 %166
  %170 = vset.pattern.permute.xlu0 0
  %171 = vperm.xlu0 %170, %v45
  %v172 = vpop.permute.xlu0 %171
  %175 = vset.pattern.permute.xlu0 0
  %176 = vperm.xlu0 %175, %v46
  %v177 = vpop.permute.xlu0 %176
  %180 = vset.pattern.permute.xlu0 0
  %181 = vperm.xlu0 %180, %v47
  %v182 = vpop.permute.xlu0 %181
  %185 = vset.pattern.permute.xlu0 0
  %186 = vperm.xlu0 %185, %v48
  %v187 = vpop.permute.xlu0 %186
  %190 = vset.pattern.permute.xlu0 0
  %191 = vperm.xlu0 %190, %v49
  %v192 = vpop.permute.xlu0 %191
  %195 = vset.pattern.permute.xlu0 0
  %196 = vperm.xlu0 %195, %v50
  %v197 = vpop.permute.xlu0 %196
  %200 = vset.pattern.permute.xlu0 0
  %201 = vperm.xlu0 %200, %v51
  %v202 = vpop.permute.xlu0 %201
  %205 = vset.pattern.permute.xlu0 0
  %206 = vperm.xlu0 %205, %v52
  %v207 = vpop.permute.xlu0 %206
  %210 = vset.pattern.permute.xlu0 0
  %211 = vperm.xlu0 %210, %v53
  %v212 = vpop.permute.xlu0 %211
  %215 = vset.pattern.permute.xlu0 0
  %216 = vperm.xlu0 %215, %v54
  %v217 = vpop.permute.xlu0 %216
  %220 = vset.pattern.permute.xlu0 0
  %221 = vperm.xlu0 %220, %v55
  %v222 = vpop.permute.xlu0 %221
  %225 = vset.pattern.permute.xlu0 0
  %226 = vperm.xlu0 %225, %v56
  %v227 = vpop.permute.xlu0 %226
  %230 = vset.pattern.permute.xlu0 0
  %231 = vperm.xlu0 %230, %v57
  %v232 = vpop.permute.xlu0 %231
  %235 = vset.pattern.permute.xlu0 0
  %236 = vperm.xlu0 %235, %v58
  %v237 = vpop.permute.xlu0 %236
  %v239 = vadd.f32 %v162, %v143
  %v240 = vadd.f32 %v167, %v144
  %v241 = vadd.f32 %v172, %v145
  %v242 = vadd.f32 %v177, %v146
  %v243 = vadd.f32 %v182, %v147
  %v244 = vadd.f32 %v187, %v148
  %v245 = vadd.f32 %v192, %v149
  %v246 = vadd.f32 %v197, %v150
  %v247 = vadd.f32 %v202, %v151
  %v248 = vadd.f32 %v207, %v152
  %v249 = vadd.f32 %v212, %v153
  %v250 = vadd.f32 %v217, %v154
  %v251 = vadd.f32 %v222, %v155
  %v252 = vadd.f32 %v227, %v156
  %v253 = vadd.f32 %v232, %v157
  %v254 = vadd.f32 %v237, %v158
  %255 = vset.pattern.permute.xlu0 1
  %256 = vperm.xlu0 %255, %v26
  %v257 = vpop.permute.xlu0 %256
  %259 = vset.pattern.permute.xlu0 1
  %260 = vperm.xlu0 %259, %v27
  %v261 = vpop.permute.xlu0 %260
  %263 = vset.pattern.permute.xlu0 1
  %264 = vperm.xlu0 %263, %v28
  %v265 = vpop.permute.xlu0 %264
  %267 = vset.pattern.permute.xlu0 1
  %268 = vperm.xlu0 %267, %v29
  %v269 = vpop.permute.xlu0 %268
  %271 = vset.pattern.permute.xlu0 1
  %272 = vperm.xlu0 %271, %v30
  %v273 = vpop.permute.xlu0 %272
  %275 = vset.pattern.permute.xlu0 1
  %276 = vperm.xlu0 %275, %v31
  %v277 = vpop.permute.xlu0 %276
  %279 = vset.pattern.permute.xlu0 1
  %280 = vperm.xlu0 %279, %v32
  %v281 = vpop.permute.xlu0 %280
  %283 = vset.pattern.permute.xlu0 1
  %284 = vperm.xlu0 %283, %v33
  %v285 = vpop.permute.xlu0 %284
  %287 = vset.pattern.permute.xlu0 1
  %288 = vperm.xlu0 %287, %v34
  %v289 = vpop.permute.xlu0 %288
  %291 = vset.pattern.permute.xlu0 1
  %292 = vperm.xlu0 %291, %v35
  %v293 = vpop.permute.xlu0 %292
  %295 = vset.pattern.permute.xlu0 1
  %296 = vperm.xlu0 %295, %v36
  %v297 = vpop.permute.xlu0 %296
  %299 = vset.pattern.permute.xlu0 1
  %300 = vperm.xlu0 %299, %v37
  %v301 = vpop.permute.xlu0 %300
  %303 = vset.pattern.permute.xlu0 1
  %304 = vperm.xlu0 %303, %v38
  %v305 = vpop.permute.xlu0 %304
  %307 = vset.pattern.permute.xlu0 1
  %308 = vperm.xlu0 %307, %v39
  %v309 = vpop.permute.xlu0 %308
  %311 = vset.pattern.permute.xlu0 1
  %312 = vperm.xlu0 %311, %v40
  %v313 = vpop.permute.xlu0 %312
  %315 = vset.pattern.permute.xlu0 1
  %316 = vperm.xlu0 %315, %v41
  %v317 = vpop.permute.xlu0 %316
  %v319 = vlaneseq
  %v320 = vshrl.u32 %v319, 7
  %v321 = vsub.s32 1, %v320
  %v322 = vrot.slane %v42, %v321
  %v323 = vmul.f32 %v257, %v322
  %v324 = vmul.f32 %v261, %v322
  %v325 = vmul.f32 %v265, %v322
  %v326 = vmul.f32 %v269, %v322
  %v327 = vmul.f32 %v273, %v322
  %v328 = vmul.f32 %v277, %v322
  %v329 = vmul.f32 %v281, %v322
  %v330 = vmul.f32 %v285, %v322
  %v331 = vmul.f32 %v289, %v322
  %v332 = vmul.f32 %v293, %v322
  %v333 = vmul.f32 %v297, %v322
  %v334 = vmul.f32 %v301, %v322
  %v335 = vmul.f32 %v305, %v322
  %v336 = vmul.f32 %v309, %v322
  %v337 = vmul.f32 %v313, %v322
  %v338 = vmul.f32 %v317, %v322
  %v339 = vadd.f32 %v239, %v323
  %v340 = vadd.f32 %v240, %v324
  %v341 = vadd.f32 %v241, %v325
  %v342 = vadd.f32 %v242, %v326
  %v343 = vadd.f32 %v243, %v327
  %v344 = vadd.f32 %v244, %v328
  %v345 = vadd.f32 %v245, %v329
  %v346 = vadd.f32 %v246, %v330
  %v347 = vadd.f32 %v247, %v331
  %v348 = vadd.f32 %v248, %v332
  %v349 = vadd.f32 %v249, %v333
  %v350 = vadd.f32 %v250, %v334
  %v351 = vadd.f32 %v251, %v335
  %v352 = vadd.f32 %v252, %v336
  %v353 = vadd.f32 %v253, %v337
  %v354 = vadd.f32 %v254, %v338
  %v355 = vmax.f32 %v339, 0.0
  %v356 = vmax.f32 %v340, 0.0
  %v357 = vmax.f32 %v341, 0.0
  %v358 = vmax.f32 %v342, 0.0
  %v359 = vmax.f32 %v343, 0.0
  %v360 = vmax.f32 %v344, 0.0
  %v361 = vmax.f32 %v345, 0.0
  %v362 = vmax.f32 %v346, 0.0
  %v363 = vmax.f32 %v347, 0.0
  %v364 = vmax.f32 %v348, 0.0
  %v365 = vmax.f32 %v349, 0.0
  %v366 = vmax.f32 %v350, 0.0
  %v367 = vmax.f32 %v351, 0.0
  %v368 = vmax.f32 %v352, 0.0
  %v369 = vmax.f32 %v353, 0.0
  %v370 = vmax.f32 %v354, 0.0
  %v371 = vld [vmem:[%s3] sm:$0xff]
  %v372 = vld [vmem:[%s3 + $0x8] sm:$0xff]
  %v373 = vld [vmem:[%s3 + $0x10] sm:$0xff]
  %v374 = vld [vmem:[%s3 + $0x18] sm:$0xff]
  %v375 = vld [vmem:[%s3 + $0x20] sm:$0xff]
  %v376 = vld [vmem:[%s3 + $0x28] sm:$0xff]
  %v377 = vld [vmem:[%s3 + $0x30] sm:$0xff]
  %v378 = vld [vmem:[%s3 + $0x38] sm:$0xff]
  %v379 = vld [vmem:[%s3 + $0x40] sm:$0xff]
  %v380 = vld [vmem:[%s3 + $0x48] sm:$0xff]
  %v381 = vld [vmem:[%s3 + $0x50] sm:$0xff]
  %v382 = vld [vmem:[%s3 + $0x58] sm:$0xff]
  %v383 = vld [vmem:[%s3 + $0x60] sm:$0xff]
  %v384 = vld [vmem:[%s3 + $0x68] sm:$0xff]
  %v385 = vld [vmem:[%s3 + $0x70] sm:$0xff]
  %v386 = vld [vmem:[%s3 + $0x78] sm:$0xff]
  %v387 = vld [vmem:[%s4] sm:$0xff]
  %v388 = vld [vmem:[%s4 + $0x8] sm:$0xff]
  %v389 = vld [vmem:[%s4 + $0x10] sm:$0xff]
  %v390 = vld [vmem:[%s4 + $0x18] sm:$0xff]
  %v391 = vld [vmem:[%s4 + $0x20] sm:$0xff]
  %v392 = vld [vmem:[%s4 + $0x28] sm:$0xff]
  %v393 = vld [vmem:[%s4 + $0x30] sm:$0xff]
  %v394 = vld [vmem:[%s4 + $0x38] sm:$0xff]
  %v395 = vld [vmem:[%s4 + $0x40] sm:$0xff]
  %v396 = vld [vmem:[%s4 + $0x48] sm:$0xff]
  %v397 = vld [vmem:[%s4 + $0x50] sm:$0xff]
  %v398 = vld [vmem:[%s4 + $0x58] sm:$0xff]
  %v399 = vld [vmem:[%s4 + $0x60] sm:$0xff]
  %v400 = vld [vmem:[%s4 + $0x68] sm:$0xff]
  %v401 = vld [vmem:[%s4 + $0x70] sm:$0xff]
  %v402 = vld [vmem:[%s4 + $0x78] sm:$0xff]
  %404 = vset.pattern.permute.xlu0 0
  %405 = vperm.xlu0 %404, %v387
  %v406 = vpop.permute.xlu0 %405
  %409 = vset.pattern.permute.xlu0 0
  %410 = vperm.xlu0 %409, %v388
  %v411 = vpop.permute.xlu0 %410
  %414 = vset.pattern.permute.xlu0 0
  %415 = vperm.xlu0 %414, %v389
  %v416 = vpop.permute.xlu0 %415
  %419 = vset.pattern.permute.xlu0 0
  %420 = vperm.xlu0 %419, %v390
  %v421 = vpop.permute.xlu0 %420
  %424 = vset.pattern.permute.xlu0 0
  %425 = vperm.xlu0 %424, %v391
  %v426 = vpop.permute.xlu0 %425
  %429 = vset.pattern.permute.xlu0 0
  %430 = vperm.xlu0 %429, %v392
  %v431 = vpop.permute.xlu0 %430
  %434 = vset.pattern.permute.xlu0 0
  %435 = vperm.xlu0 %434, %v393
  %v436 = vpop.permute.xlu0 %435
  %439 = vset.pattern.permute.xlu0 0
  %440 = vperm.xlu0 %439, %v394
  %v441 = vpop.permute.xlu0 %440
  %444 = vset.pattern.permute.xlu0 0
  %445 = vperm.xlu0 %444, %v395
  %v446 = vpop.permute.xlu0 %445
  %449 = vset.pattern.permute.xlu0 0
  %450 = vperm.xlu0 %449, %v396
  %v451 = vpop.permute.xlu0 %450
  %454 = vset.pattern.permute.xlu0 0
  %455 = vperm.xlu0 %454, %v397
  %v456 = vpop.permute.xlu0 %455
  %459 = vset.pattern.permute.xlu0 0
  %460 = vperm.xlu0 %459, %v398
  %v461 = vpop.permute.xlu0 %460
  %464 = vset.pattern.permute.xlu0 0
  %465 = vperm.xlu0 %464, %v399
  %v466 = vpop.permute.xlu0 %465
  %469 = vset.pattern.permute.xlu0 0
  %470 = vperm.xlu0 %469, %v400
  %v471 = vpop.permute.xlu0 %470
  %474 = vset.pattern.permute.xlu0 0
  %475 = vperm.xlu0 %474, %v401
  %v476 = vpop.permute.xlu0 %475
  %479 = vset.pattern.permute.xlu0 0
  %480 = vperm.xlu0 %479, %v402
  %v481 = vpop.permute.xlu0 %480
  %483 = vmatprep.subr.mxu0 0.0
  %484 = vmatpush1.msra.mxu0 %v355
  %485 = vmatprep.subr.mxu0 0.0
  %486 = vmatpush1.msra.mxu0 %v356
  %487 = vmatprep.subr.mxu0 0.0
  %488 = vmatpush1.msra.mxu0 %v357
  %489 = vmatprep.subr.mxu0 0.0
  %490 = vmatpush1.msra.mxu0 %v358
  %491 = vmatprep.subr.mxu0 0.0
  %492 = vmatpush1.msra.mxu0 %v359
  %493 = vmatprep.subr.mxu0 0.0
  %494 = vmatpush1.msra.mxu0 %v360
  %495 = vmatprep.subr.mxu0 0.0
  %496 = vmatpush1.msra.mxu0 %v361
  %497 = vmatprep.subr.mxu0 0.0
  %498 = vmatpush1.msra.mxu0 %v362
  %499 = vmatprep.subr.mxu0 0.0
  %500 = vmatpush1.msra.mxu0 %v363
  %501 = vmatprep.subr.mxu0 0.0
  %502 = vmatpush1.msra.mxu0 %v364
  %503 = vmatprep.subr.mxu0 0.0
  %504 = vmatpush1.msra.mxu0 %v365
  %505 = vmatprep.subr.mxu0 0.0
  %506 = vmatpush1.msra.mxu0 %v366
  %507 = vmatprep.subr.mxu0 0.0
  %508 = vmatpush1.msra.mxu0 %v367
  %509 = vmatprep.subr.mxu0 0.0
  %510 = vmatpush1.msra.mxu0 %v368
  %511 = vmatprep.subr.mxu0 0.0
  %512 = vmatpush1.msra.mxu0 %v369
  %513 = vmatprep.subr.mxu0 0.0
  %514 = vmatpush1.msra.mxu0 %v370
  %515 = vmatprep.subr.mxu0 0.0
  %516 = vmatpush1.msra.mxu0 0.0
  %517 = vmatprep.subr.mxu0 0.0
  %518 = vmatpush1.msra.mxu0 0.0
  %519 = vmatprep.subr.mxu0 0.0
  %520 = vmatpush1.msra.mxu0 0.0
  %521 = vmatprep.subr.mxu0 0.0
  %522 = vmatpush1.msra.mxu0 0.0
  %523 = vmatprep.subr.mxu0 0.0
  %524 = vmatpush1.msra.mxu0 0.0
  %525 = vmatprep.subr.mxu0 0.0
  %526 = vmatpush1.msra.mxu0 0.0
  %527 = vmatprep.subr.mxu0 0.0
  %528 = vmatpush1.msra.mxu0 0.0
  %529 = vmatprep.subr.mxu0 0.0
  %530 = vmatpush1.msra.mxu0 0.0
  %531 = vmatprep.subr.mxu0 0.0
  %532 = vmatpush1.msra.mxu0 0.0
  %533 = vmatprep.subr.mxu0 0.0
  %534 = vmatpush1.msra.mxu0 0.0
  %535 = vmatprep.subr.mxu0 0.0
  %536 = vmatpush1.msra.mxu0 0.0
  %537 = vmatprep.subr.mxu0 0.0
  %538 = vmatpush1.msra.mxu0 0.0
  %539 = vmatprep.subr.mxu0 0.0
  %540 = vmatpush1.msra.mxu0 0.0
  %541 = vmatprep.subr.mxu0 0.0
  %542 = vmatpush1.msra.mxu0 0.0
  %543 = vmatprep.subr.mxu0 0.0
  %544 = vmatpush1.msra.mxu0 0.0
  %545 = vmatprep.subr.mxu0 0.0
  %546 = vmatpush1.msra.mxu0 0.0
  %547 = vmatprep.mubr.f32.mxu0 0.0
  %548 = vmatmul.mubr.f32.gmra.mrb[0].mxu0 %v371
  %v549 = vpop.f32.mrb[0].mxu0
  %v550 = vadd.f32 %v406, %v549
  %v551 = vpop.f32.mrb[0].mxu0
  %552 = vmatprep.mubr.f32.mxu0 0.0
  %553 = vmatmul.mubr.f32.gmra.mrb[0].mxu0 %v372
  %v554 = vpop.f32.mrb[0].mxu0
  %v555 = vadd.f32 %v411, %v554
  %v556 = vpop.f32.mrb[0].mxu0
  %557 = vmatprep.mubr.f32.mxu0 0.0
  %558 = vmatmul.mubr.f32.gmra.mrb[0].mxu0 %v373
  %v559 = vpop.f32.mrb[0].mxu0
  %v560 = vadd.f32 %v416, %v559
  %v561 = vpop.f32.mrb[0].mxu0
  %562 = vmatprep.mubr.f32.mxu0 0.0
  %563 = vmatmul.mubr.f32.gmra.mrb[0].mxu0 %v374
  %v564 = vpop.f32.mrb[0].mxu0
  %v565 = vadd.f32 %v421, %v564
  %v566 = vpop.f32.mrb[0].mxu0
  %567 = vmatprep.mubr.f32.mxu0 0.0
  %568 = vmatmul.mubr.f32.gmra.mrb[0].mxu0 %v375
  %v569 = vpop.f32.mrb[0].mxu0
  %v570 = vadd.f32 %v426, %v569
  %v571 = vpop.f32.mrb[0].mxu0
  %572 = vmatprep.mubr.f32.mxu0 0.0
  %573 = vmatmul.mubr.f32.gmra.mrb[0].mxu0 %v376
  %v574 = vpop.f32.mrb[0].mxu0
  %v575 = vadd.f32 %v431, %v574
  %v576 = vpop.f32.mrb[0].mxu0
  %577 = vmatprep.mubr.f32.mxu0 0.0
  %578 = vmatmul.mubr.f32.gmra.mrb[0].mxu0 %v377
  %v579 = vpop.f32.mrb[0].mxu0
  %v580 = vadd.f32 %v436, %v579
  %v581 = vpop.f32.mrb[0].mxu0
  %582 = vmatprep.mubr.f32.mxu0 0.0
  %583 = vmatmul.mubr.f32.gmra.mrb[0].mxu0 %v378
  %v584 = vpop.f32.mrb[0].mxu0
  %v585 = vadd.f32 %v441, %v584
  %v586 = vpop.f32.mrb[0].mxu0
  %587 = vmatprep.mubr.f32.mxu0 0.0
  %588 = vmatmul.mubr.f32.gmra.mrb[0].mxu0 %v379
  %v589 = vpop.f32.mrb[0].mxu0
  %v590 = vadd.f32 %v446, %v589
  %v591 = vpop.f32.mrb[0].mxu0
  %592 = vmatprep.mubr.f32.mxu0 0.0
  %593 = vmatmul.mubr.f32.gmra.mrb[0].mxu0 %v380
  %v594 = vpop.f32.mrb[0].mxu0
  %v595 = vadd.f32 %v451, %v594
  %v596 = vpop.f32.mrb[0].mxu0
  %597 = vmatprep.mubr.f32.mxu0 0.0
  %598 = vmatmul.mubr.f32.gmra.mrb[0].mxu0 %v381
  %v599 = vpop.f32.mrb[0].mxu0
  %v600 = vadd.f32 %v456, %v599
  %v601 = vpop.f32.mrb[0].mxu0
  %602 = vmatprep.mubr.f32.mxu0 0.0
  %603 = vmatmul.mubr.f32.gmra.mrb[0].mxu0 %v382
  %v604 = vpop.f32.mrb[0].mxu0
  %v605 = vadd.f32 %v461, %v604
  %v606 = vpop.f32.mrb[0].mxu0
  %607 = vmatprep.mubr.f32.mxu0 0.0
  %608 = vmatmul.mubr.f32.gmra.mrb[0].mxu0 %v383
  %v609 = vpop.f32.mrb[0].mxu0
  %v610 = vadd.f32 %v466, %v609
  %v611 = vpop.f32.mrb[0].mxu0
  %612 = vmatprep.mubr.f32.mxu0 0.0
  %613 = vmatmul.mubr.f32.gmra.mrb[0].mxu0 %v384
  %v614 = vpop.f32.mrb[0].mxu0
  %v615 = vadd.f32 %v471, %v614
  %v616 = vpop.f32.mrb[0].mxu0
  %617 = vmatprep.mubr.f32.mxu0 0.0
  %618 = vmatmul.mubr.f32.gmra.mrb[0].mxu0 %v385
  %v619 = vpop.f32.mrb[0].mxu0
  %v620 = vadd.f32 %v476, %v619
  %v621 = vpop.f32.mrb[0].mxu0
  %622 = vmatprep.mubr.f32.mxu0 0.0
  %623 = vmatmul.mubr.f32.gmra.mrb[0].mxu0 %v386
  %v624 = vpop.f32.mrb[0].mxu0
  %v625 = vadd.f32 %v481, %v624
  %v626 = vpop.f32.mrb[0].mxu0
  %627 = vdwg.mxu0
  %v628 = vmax.f32 %v550, 0.0
  %v629 = vmax.f32 %v555, 0.0
  %v630 = vmax.f32 %v560, 0.0
  %v631 = vmax.f32 %v565, 0.0
  %v632 = vmax.f32 %v570, 0.0
  %v633 = vmax.f32 %v575, 0.0
  %v634 = vmax.f32 %v580, 0.0
  %v635 = vmax.f32 %v585, 0.0
  %v636 = vmax.f32 %v590, 0.0
  %v637 = vmax.f32 %v595, 0.0
  %v638 = vmax.f32 %v600, 0.0
  %v639 = vmax.f32 %v605, 0.0
  %v640 = vmax.f32 %v610, 0.0
  %v641 = vmax.f32 %v615, 0.0
  %v642 = vmax.f32 %v620, 0.0
  %v643 = vmax.f32 %v625, 0.0
  %v644 = vld [vmem:[%s5] sm:$0xff]
  %v645 = vld [vmem:[%s5 + $0x8] sm:$0xff]
  %v646 = vld [vmem:[%s6] sm:$0xff]
  %v647 = vld [vmem:[%s6 + $0x8] sm:$0xff]
  %649 = vset.pattern.permute.xlu0 0
  %650 = vperm.xlu0 %649, %v646
  %v651 = vpop.permute.xlu0 %650
  %654 = vset.pattern.permute.xlu0 0
  %655 = vperm.xlu0 %654, %v647
  %v656 = vpop.permute.xlu0 %655
  %658 = vmatprep.subr.mxu0 0.0
  %659 = vmatpush1.msra.mxu0 %v628
  %660 = vmatprep.subr.mxu0 0.0
  %661 = vmatpush1.msra.mxu0 %v629
  %662 = vmatprep.subr.mxu0 0.0
  %663 = vmatpush1.msra.mxu0 %v630
  %664 = vmatprep.subr.mxu0 0.0
  %665 = vmatpush1.msra.mxu0 %v631
  %666 = vmatprep.subr.mxu0 0.0
  %667 = vmatpush1.msra.mxu0 %v632
  %668 = vmatprep.subr.mxu0 0.0
  %669 = vmatpush1.msra.mxu0 %v633
  %670 = vmatprep.subr.mxu0 0.0
  %671 = vmatpush1.msra.mxu0 %v634
  %672 = vmatprep.subr.mxu0 0.0
  %673 = vmatpush1.msra.mxu0 %v635
  %674 = vmatprep.subr.mxu0 0.0
  %675 = vmatpush1.msra.mxu0 %v636
  %676 = vmatprep.subr.mxu0 0.0
  %677 = vmatpush1.msra.mxu0 %v637
  %678 = vmatprep.subr.mxu0 0.0
  %679 = vmatpush1.msra.mxu0 %v638
  %680 = vmatprep.subr.mxu0 0.0
  %681 = vmatpush1.msra.mxu0 %v639
  %682 = vmatprep.subr.mxu0 0.0
  %683 = vmatpush1.msra.mxu0 %v640
  %684 = vmatprep.subr.mxu0 0.0
  %685 = vmatpush1.msra.mxu0 %v641
  %686 = vmatprep.subr.mxu0 0.0
  %687 = vmatpush1.msra.mxu0 %v642
  %688 = vmatprep.subr.mxu0 0.0
  %689 = vmatpush1.msra.mxu0 %v643
  %690 = vmatprep.subr.mxu0 0.0
  %691 = vmatpush1.msra.mxu0 0.0
  %692 = vmatprep.subr.mxu0 0.0
  %693 = vmatpush1.msra.mxu0 0.0
  %694 = vmatprep.subr.mxu0 0.0
  %695 = vmatpush1.msra.mxu0 0.0
  %696 = vmatprep.subr.mxu0 0.0
  %697 = vmatpush1.msra.mxu0 0.0
  %698 = vmatprep.subr.mxu0 0.0
  %699 = vmatpush1.msra.mxu0 0.0
  %700 = vmatprep.subr.mxu0 0.0
  %701 = vmatpush1.msra.mxu0 0.0
  %702 = vmatprep.subr.mxu0 0.0
  %703 = vmatpush1.msra.mxu0 0.0
  %704 = vmatprep.subr.mxu0 0.0
  %705 = vmatpush1.msra.mxu0 0.0
  %706 = vmatprep.subr.mxu0 0.0
  %707 = vmatpush1.msra.mxu0 0.0
  %708 = vmatprep.subr.mxu0 0.0
  %709 = vmatpush1.msra.mxu0 0.0
  %710 = vmatprep.subr.mxu0 0.0
  %711 = vmatpush1.msra.mxu0 0.0
  %712 = vmatprep.subr.mxu0 0.0
  %713 = vmatpush1.msra.mxu0 0.0
  %714 = vmatprep.subr.mxu0 0.0
  %715 = vmatpush1.msra.mxu0 0.0
  %716 = vmatprep.subr.mxu0 0.0
  %717 = vmatpush1.msra.mxu0 0.0
  %718 = vmatprep.subr.mxu0 0.0
  %719 = vmatpush1.msra.mxu0 0.0
  %720 = vmatprep.subr.mxu0 0.0
  %721 = vmatpush1.msra.mxu0 0.0
  %722 = vmatprep.mubr.f32.mxu0 0.0
  %723 = vmatmul.mubr.f32.gmra.mrb[0].mxu0 %v644
  %v724 = vpop.f32.mrb[0].mxu0
  %v725 = vadd.f32 %v651, %v724
  %v726 = vpop.f32.mrb[0].mxu0
  %727 = vmatprep.mubr.f32.mxu0 0.0
  %728 = vmatmul.mubr.f32.gmra.mrb[0].mxu0 %v645
  %v729 = vpop.f32.mrb[0].mxu0
  %v730 = vadd.f32 %v656, %v729
  %v731 = vpop.f32.mrb[0].mxu0
  %732 = vdwg.mxu0
  %v733 = vlaneseq
  %v734 = vshrl.u32 %v733, 7
  %v735 = vadd.s32 %v734, 8
  %vm736 = vcmp.ge.s32.totalorder %v734, 6
  %vm737 = vcmp.ge.s32.totalorder %v735, 6
  %vm738 = vcmp.lt.s32.totalorder %v734, 9
  %vm739 = vcmp.lt.s32.totalorder %v735, 9
  %vm740 = vmand %vm736, %vm738
  %vm741 = vmand %vm737, %vm739
  %v742 = vmul.f32 %v725, 1.442695
  %v743 = vpow.pop %v742
  %v744 = vmul.f32 %v730, 1.442695
  %v745 = vpow.pop %v744
  %v746 = vsel %vm740, %v743, %v725
  %v747 = vsel %vm741, %v745, %v730
  %748 = vst [vmem:[%s7] sm:$0xff] %v746
  %749 = vst [vmem:[%s7 + $0x8] sm:$0xff] %v747
  // Predicated region
  $region30: #{mdn_forward.1} parent=0 // pred_check
    _
  $region31: #{mdn_forward.1} parent=0 // pred_check_branch
    %751 = sbr.rel (0) target = $region33
  $region32: #{mdn_forward.1} parent=0 // pred_region
    _
  $region33: #{mdn_forward.1} parent=0 // pred_fallthru
    _
  // Predicated region
  $region34: #{mdn_forward.1} parent=0 // pred_check
    _
  $region35: #{mdn_forward.1} parent=0 // pred_check_branch
    %753 = sbr.rel (0) target = $region37
  $region36: #{mdn_forward.1} parent=0 // pred_region
    _
  $region37: #{mdn_forward.1} parent=0 // pred_fallthru
    _

</llo_original>
